<compile_context>
chip_gen: v5e
topology: v5e:2x2
jax: 0.10.0
libtpu: 0.0.40
codegen_flags: <defaults>
</compile_context>

<pallas_src>
import math

import jax
import jax.numpy as jnp
from jax.experimental import pallas as pl
from jax.experimental.pallas import tpu as pltpu


# ----------------------------------------------------------------------------
# Helpers
# ----------------------------------------------------------------------------
_SQRT_2_OVER_PI = math.sqrt(2.0 / math.pi)


def _gelu(x):
    # tanh-approximate GELU (EUP op, effectively free next to MXU work).
    return 0.5 * x * (1.0 + jnp.tanh(_SQRT_2_OVER_PI * (x + 0.044715 * x * x * x)))


def _round_up(n, m):
    return (n + m - 1) // m * m


def _pick_tile(dim, target, align):
    """Largest tile <= target that is a multiple of `align` and divides `dim`.

    Falls back to the full dimension (always a legal block size) when the
    dimension is small or no aligned divisor exists.
    """
    if dim <= target:
        return dim
    t = (target // align) * align
    while t >= align:
        if dim % t == 0:
            return t
        t -= align
    return dim


# ----------------------------------------------------------------------------
# Fused MLP kernel:  y = gelu(x @ Wfc + bfc) @ Wproj + bproj
# grid = (M/tm, H/th); hidden tile (tm, th) lives only in VMEM.
# ----------------------------------------------------------------------------
def _mlp_kernel(x_ref, wfc_ref, bfc_ref, wproj_ref, bproj_ref, o_ref, acc_ref):
    j = pl.program_id(1)

    @pl.when(j == 0)
    def _():
        acc_ref[...] = jnp.zeros_like(acc_ref)

    # GEMM 1 slice (full C reduction in one MXU call), bias + GELU in f32.
    h = jnp.dot(x_ref[...], wfc_ref[...], preferred_element_type=jnp.float32)
    h = _gelu(h + bfc_ref[...])

    # GEMM 2 partial accumulation over the hidden-chunk axis j.
    acc_ref[...] += jnp.dot(
        h.astype(jnp.bfloat16), wproj_ref[...], preferred_element_type=jnp.float32
    )

    @pl.when(j == pl.num_programs(1) - 1)
    def _():
        o_ref[...] = (acc_ref[...] + bproj_ref[...]).astype(o_ref.dtype)


# ----------------------------------------------------------------------------
# Wrapper
# ----------------------------------------------------------------------------
def mlp_forward(x, params, *, tm_target=512, th_target=512):
    """Forward pass equivalent to MLP.forward (eval mode).

    x: (B, T, C) f32.  params: w_fc (C, 4C), b_fc (4C,), w_proj (4C, C), b_proj (C,).
    """
    B, T, C = x.shape
    H = params["w_fc"].shape[1]
    assert params["w_fc"].shape == (C, H)
    assert params["w_proj"].shape == (H, C)
    M = B * T

    # bf16 operands (f32 accumulation in-kernel).  Cast here so the HBM copies
    # themselves are bf16, not just an in-kernel astype.
    xb = x.reshape(M, C).astype(jnp.bfloat16)
    wfc = params["w_fc"].astype(jnp.bfloat16)
    wproj = params["w_proj"].astype(jnp.bfloat16)
    bfc = params["b_fc"].astype(jnp.float32).reshape(1, H)
    bproj = params["b_proj"].astype(jnp.float32).reshape(1, C)

    # M tiling: 16-aligned for bf16 sublane packing; pad instead of letting a
    # non-divisible M force a full-dimension block.
    tm = min(tm_target, _round_up(M, 16))
    m_pad = _round_up(M, tm)
    if m_pad != M:
        xb = jnp.pad(xb, ((0, m_pad - M), (0, 0)))

    # Hidden-chunk tile: lane-aligned (128) divisor of H (= 4C).
    th = _pick_tile(H, th_target, 128)

    grid = (m_pad // tm, H // th)

    # Working-set estimate (double-buffered inputs/outputs + f32 accumulator),
    # used to set the scoped-VMEM limit; capped at 64 MiB to stay v7x-safe.
    est = (
        2 * (tm * C * 2)      # x tile (bf16)
        + 2 * (C * th * 2)    # w_fc block (bf16)
        + 2 * (th * C * 2)    # w_proj block (bf16)
        + 2 * (tm * C * 4)    # output tile (f32)
        + (tm * C * 4)        # f32 accumulator scratch
        + 2 * (th + C) * 4    # biases
    )
    vmem_limit = min(64 * 1024 * 1024, max(32 * 1024 * 1024, 2 * est))

    out = pl.pallas_call(
        _mlp_kernel,
        out_shape=jax.ShapeDtypeStruct((m_pad, C), jnp.float32),
        grid_spec=pltpu.PrefetchScalarGridSpec(
            num_scalar_prefetch=0,
            grid=grid,
            in_specs=[
                pl.BlockSpec((tm, C), lambda i, j: (i, 0)),   # x tile (reused over j)
                pl.BlockSpec((C, th), lambda i, j: (0, j)),   # W_fc column block
                pl.BlockSpec((1, th), lambda i, j: (0, j)),   # b_fc chunk
                pl.BlockSpec((th, C), lambda i, j: (j, 0)),   # W_proj row block
                pl.BlockSpec((1, C), lambda i, j: (0, 0)),    # b_proj
            ],
            out_specs=pl.BlockSpec((tm, C), lambda i, j: (i, 0)),
            scratch_shapes=[pltpu.VMEM((tm, C), jnp.float32)],
        ),
        compiler_params=pltpu.CompilerParams(
            dimension_semantics=("parallel", "arbitrary"),
            vmem_limit_bytes=vmem_limit,
        ),
    )(xb, wfc, bfc, wproj, bproj)

    # dropout: identity (eval / p = 0)
    return out[:M].reshape(B, T, C)


# ----------------------------------------------------------------------------
# Pure-JAX reference (same bf16-operand / f32-accumulate numerics)
# ----------------------------------------------------------------------------
def mlp_ref(x, params):
    B, T, C = x.shape
    x2 = x.reshape(B * T, C).astype(jnp.bfloat16)
    h = (
        jnp.dot(x2, params["w_fc"].astype(jnp.bfloat16),
                preferred_element_type=jnp.float32)
        + params["b_fc"]
    )
    h = _gelu(h).astype(jnp.bfloat16)
    y = (
        jnp.dot(h, params["w_proj"].astype(jnp.bfloat16),
                preferred_element_type=jnp.float32)
        + params["b_proj"]
    )
    return y.reshape(B, T, C).astype(jnp.float32)


# ----------------------------------------------------------------------------
# Main
# ----------------------------------------------------------------------------
if __name__ == "__main__":
    # small config: B=2, seq T=8, n_embd=32 -> hidden 4*C = 128
    # NOTE: at these demo sizes per-call overhead dominates and grid=(1,1);
    #       tiling/megacore sharding kick in at production shapes
    #       (B*T >= 4096, C >= 1024).
    B, T, C = 2, 8, 32
    H = 4 * C

    key = jax.random.PRNGKey(0)
    kx, k1, k2, k3, k4 = jax.random.split(key, 5)

    x = jax.random.normal(kx, (B, T, C), dtype=jnp.float32)

    scale = 0.02
    params = {
        "w_fc": scale * jax.random.normal(k1, (C, H), dtype=jnp.float32),
        "b_fc": scale * jax.random.normal(k2, (H,), dtype=jnp.float32),
        "w_proj": scale * jax.random.normal(k3, (H, C), dtype=jnp.float32),
        "b_proj": scale * jax.random.normal(k4, (C,), dtype=jnp.float32),
    }

    out = jax.block_until_ready(mlp_forward(x, params))
    ref = mlp_ref(x, params)

    assert out.shape == (B, T, C)
    assert jnp.allclose(out, ref, atol=1e-2, rtol=1e-2), "mismatch vs reference"

    print("KERNEL_OK")
</pallas_src>

<mosaic_0001>
module attributes {stable_mosaic.version = 11 : i64} {
  func.func @_mlp_kernel(%arg0: i32, %arg1: i32, %arg2: memref<16x32xbf16, #tpu.memory_space<vmem>>, %arg3: memref<32x128xbf16, #tpu.memory_space<vmem>>, %arg4: memref<1x128xf32, #tpu.memory_space<vmem>>, %arg5: memref<128x32xbf16, #tpu.memory_space<vmem>>, %arg6: memref<1x32xf32, #tpu.memory_space<vmem>>, %arg7: memref<16x32xf32, #tpu.memory_space<vmem>>, %arg8: memref<16x32xf32, #tpu.memory_space<vmem>>) attributes {dimension_semantics = [#tpu.dimension_semantics<parallel>, #tpu.dimension_semantics<arbitrary>], iteration_bounds = array<i64: 1, 1>, scalar_prefetch = 0 : i64, scratch_operands = 1 : i64, tpu.core_type = #tpu.core_type<tc>, window_params = [{transform_indices = @transform_0, window_bounds = array<i64: 16, 32>}, {transform_indices = @transform_1, window_bounds = array<i64: 32, 128>}, {transform_indices = @transform_2, window_bounds = array<i64: 1, 128>}, {transform_indices = @transform_3, window_bounds = array<i64: 128, 32>}, {pipeline_mode = #tpu.pipeline_mode<synchronous>, transform_indices = @transform_4, window_bounds = array<i64: 1, 32>}, {transform_indices = @transform_5, window_bounds = array<i64: 16, 32>}]} {
    %c0_i32 = arith.constant 0 : i32
    %0 = arith.cmpi eq, %arg1, %c0_i32 : i32
    %1 = arith.extui %0 : i1 to i32
    %c0_i32_0 = arith.constant 0 : i32
    %2 = arith.cmpi ne, %1, %c0_i32_0 : i32
    scf.if %2 {
      %cst_19 = arith.constant 0.000000e+00 : f32
      %31 = vector.broadcast %cst_19 : f32 to vector<16x32xf32>
      %c0_20 = arith.constant 0 : index
      %c0_21 = arith.constant 0 : index
      %32 = vector.load %arg8[%c0_20, %c0_21] : memref<16x32xf32, #tpu.memory_space<vmem>>, vector<16x32xf32>
      tpu.vector_store %arg8[%c0_20, %c0_21], %31 {strides = array<i32>} : memref<16x32xf32, #tpu.memory_space<vmem>>, vector<16x32xf32>,
    } else {
    }
    %c0 = arith.constant 0 : index
    %c0_1 = arith.constant 0 : index
    %3 = vector.load %arg2[%c0, %c0_1] : memref<16x32xbf16, #tpu.memory_space<vmem>>, vector<16x32xbf16>
    %c0_2 = arith.constant 0 : index
    %c0_3 = arith.constant 0 : index
    %4 = vector.load %arg3[%c0_2, %c0_3] : memref<32x128xbf16, #tpu.memory_space<vmem>>, vector<32x128xbf16>
    %cst = arith.constant dense<0.000000e+00> : vector<16x128xf32>
    %5 = tpu.matmul %3, %4, %cst {dimension_numbers = #tpu.dot_dimension_numbers<[1], [0], [0], [1], [0, 0, 1, 1], [], []>} : vector<16x32xbf16>, vector<32x128xbf16>, vector<16x128xf32> -> vector<16x128xf32>
    %c0_4 = arith.constant 0 : index
    %c0_5 = arith.constant 0 : index
    %6 = vector.load %arg4[%c0_4, %c0_5] : memref<1x128xf32, #tpu.memory_space<vmem>>, vector<1x128xf32>
    %7 = vector.broadcast %6 : vector<1x128xf32> to vector<16x128xf32>
    %8 = arith.addf %5, %7 : vector<16x128xf32>
    %cst_6 = arith.constant 5.000000e-01 : f32
    %9 = vector.broadcast %cst_6 : f32 to vector<16x128xf32>
    %10 = arith.mulf %9, %8 : vector<16x128xf32>
    %cst_7 = arith.constant 4.471500e-02 : f32
    %11 = vector.broadcast %cst_7 : f32 to vector<16x128xf32>
    %12 = arith.mulf %11, %8 : vector<16x128xf32>
    %13 = arith.mulf %12, %8 : vector<16x128xf32>
    %14 = arith.mulf %13, %8 : vector<16x128xf32>
    %15 = arith.addf %8, %14 : vector<16x128xf32>
    %cst_8 = arith.constant 0.797884583 : f32
    %16 = vector.broadcast %cst_8 : f32 to vector<16x128xf32>
    %17 = arith.mulf %16, %15 : vector<16x128xf32>
    %18 = math.tanh %17 : vector<16x128xf32>
    %cst_9 = arith.constant 1.000000e+00 : f32
    %19 = vector.broadcast %cst_9 : f32 to vector<16x128xf32>
    %20 = arith.addf %19, %18 : vector<16x128xf32>
    %21 = arith.mulf %10, %20 : vector<16x128xf32>
    %c0_10 = arith.constant 0 : index
    %c0_11 = arith.constant 0 : index
    %22 = vector.load %arg8[%c0_10, %c0_11] : memref<16x32xf32, #tpu.memory_space<vmem>>, vector<16x32xf32>
    %23 = arith.truncf %21 : vector<16x128xf32> to vector<16x128xbf16>
    %c0_12 = arith.constant 0 : index
    %c0_13 = arith.constant 0 : index
    %24 = vector.load %arg5[%c0_12, %c0_13] : memref<128x32xbf16, #tpu.memory_space<vmem>>, vector<128x32xbf16>
    %cst_14 = arith.constant dense<0.000000e+00> : vector<16x32xf32>
    %25 = tpu.matmul %23, %24, %cst_14 {dimension_numbers = #tpu.dot_dimension_numbers<[1], [0], [0], [1], [0, 0, 1, 1], [], []>} : vector<16x128xbf16>, vector<128x32xbf16>, vector<16x32xf32> -> vector<16x32xf32>
    %26 = arith.addf %22, %25 : vector<16x32xf32>
    %c0_15 = arith.constant 0 : index
    %c0_16 = arith.constant 0 : index
    %27 = vector.load %arg8[%c0_15, %c0_16] : memref<16x32xf32, #tpu.memory_space<vmem>>, vector<16x32xf32>
    tpu.vector_store %arg8[%c0_15, %c0_16], %26 {strides = array<i32>} : memref<16x32xf32, #tpu.memory_space<vmem>>, vector<16x32xf32>,
    %c0_i32_17 = arith.constant 0 : i32
    %28 = arith.cmpi eq, %arg1, %c0_i32_17 : i32
    %29 = arith.extui %28 : i1 to i32
    %c0_i32_18 = arith.constant 0 : i32
    %30 = arith.cmpi ne, %29, %c0_i32_18 : i32
    scf.if %30 {
      %c0_19 = arith.constant 0 : index
      %c0_20 = arith.constant 0 : index
      %31 = vector.load %arg8[%c0_19, %c0_20] : memref<16x32xf32, #tpu.memory_space<vmem>>, vector<16x32xf32>
      %c0_21 = arith.constant 0 : index
      %c0_22 = arith.constant 0 : index
      %32 = vector.load %arg6[%c0_21, %c0_22] : memref<1x32xf32, #tpu.memory_space<vmem>>, vector<1x32xf32>
      %33 = vector.broadcast %32 : vector<1x32xf32> to vector<16x32xf32>
      %34 = arith.addf %31, %33 : vector<16x32xf32>
      %c0_23 = arith.constant 0 : index
      %c0_24 = arith.constant 0 : index
      %35 = vector.load %arg7[%c0_23, %c0_24] : memref<16x32xf32, #tpu.memory_space<vmem>>, vector<16x32xf32>
      tpu.vector_store %arg7[%c0_23, %c0_24], %34 {strides = array<i32>} : memref<16x32xf32, #tpu.memory_space<vmem>>, vector<16x32xf32>,
    } else {
    }
    return
  }
  func.func @transform_0(%arg0: i32, %arg1: i32) -> (i32, i32) {
    %c0_i32 = arith.constant 0 : i32
    %c0_i32_0 = arith.constant 0 : i32
    return %arg0, %c0_i32 : i32, i32
  }
  func.func @transform_1(%arg0: i32, %arg1: i32) -> (i32, i32) {
    %c0_i32 = arith.constant 0 : i32
    %c0_i32_0 = arith.constant 0 : i32
    return %c0_i32, %arg1 : i32, i32
  }
  func.func @transform_2(%arg0: i32, %arg1: i32) -> (i32, i32) {
    %c0_i32 = arith.constant 0 : i32
    %c0_i32_0 = arith.constant 0 : i32
    return %c0_i32, %arg1 : i32, i32
  }
  func.func @transform_3(%arg0: i32, %arg1: i32) -> (i32, i32) {
    %c0_i32 = arith.constant 0 : i32
    %c0_i32_0 = arith.constant 0 : i32
    return %arg1, %c0_i32 : i32, i32
  }
  func.func @transform_4(%arg0: i32, %arg1: i32) -> (i32, i32) {
    %c0_i32 = arith.constant 0 : i32
    %c0_i32_0 = arith.constant 0 : i32
    %c0_i32_1 = arith.constant 0 : i32
    return %c0_i32, %c0_i32_0 : i32, i32
  }
  func.func @transform_5(%arg0: i32, %arg1: i32) -> (i32, i32) {
    %c0_i32 = arith.constant 0 : i32
    %c0_i32_0 = arith.constant 0 : i32
    return %arg0, %c0_i32 : i32, i32
  }
}

</mosaic_0001>

<llo_original>
// kernel: tpu_custom_call.1
$region0: #{tpu_custom_call.1}
  #allocation0 [shape = 'u32[]', space=smem, size = 0x4, offset = 0x4, fixed_abs, tag = 'smem constant byte address 0x4 - core index']
  #allocation1 [shape = 'u32[72,128]{1,0:T(1,128)}', space=vmem, size = 0x9000, scoped, tag = 'internal scratch']
  #allocation2 [shape = 'f32[16,32]{1,0:T(8,128)}', space=vmem, size = 0x2000, scoped, tag = 'scratch operand']
  %s0 = inlined_call_operand.vmem [shape: bf16[16,32], index: 0, kind: input, shape index: {}]
  %s1 = inlined_call_operand.vmem [shape: bf16[32,128], index: 1, kind: input, shape index: {}]
  %s2 = inlined_call_operand.vmem [shape: f32[1,128], index: 2, kind: input, shape index: {}]
  %s3 = inlined_call_operand.vmem [shape: bf16[128,32], index: 3, kind: input, shape index: {}]
  %s4 = inlined_call_operand.vmem [shape: f32[1,32], index: 4, kind: input, shape index: {}]
  %s5 = inlined_call_operand.hbm [shape: f32[16,32], index: 5, kind: output, shape index: {}]
  %s6 = sld [smem:[#allocation0]]
  $region38: #{tpu_custom_call.1} parent=0
    _
  %s8 = ssub.s32 1, %s6
  %s9 = scalar_select 0, %s8, %s6
  $region1: #{tpu_custom_call.1} parent=0
    #allocation3 [shape = 'u8[8192]{0}', space=vmem, size = 0x2000, scoped, tag = 'output window, operand 0, single buffered']
    #allocation4 [shape = 's32[1]{0}', space=sflag, size = 0x4, scoped, tag = 'scoped memory for tpu_custom_call.1']
    %10 = vsyncpa [#allocation4], 0
    // Predicated region
    $region2: #{tpu_custom_call.1} parent=1 // pred_check
      _
    $region3: #{tpu_custom_call.1} parent=1 // pred_check_branch
      %12 = sbr.rel (0) target = $region5
    $region4: #{tpu_custom_call.1} parent=1 // pred_region
      _
    $region5: #{tpu_custom_call.1} parent=1 // pred_fallthru
      _
    // Predicated region
    $region6: #{tpu_custom_call.1} parent=1 // pred_check
      _
    $region7: #{tpu_custom_call.1} parent=1 // pred_check_branch
      %14 = sbr.rel (0) target = $region9
    $region8: #{tpu_custom_call.1} parent=1 // pred_region
      _
    $region9: #{tpu_custom_call.1} parent=1 // pred_fallthru
      _
    // Predicated region
    $region10: #{tpu_custom_call.1} parent=1 // pred_check
      _
    $region11: #{tpu_custom_call.1} parent=1 // pred_check_branch
      %16 = sbr.rel (0) target = $region13
    $region12: #{tpu_custom_call.1} parent=1 // pred_region
      _
    $region13: #{tpu_custom_call.1} parent=1 // pred_fallthru
      _
    // Predicated region
    $region14: #{tpu_custom_call.1} parent=1 // pred_check
      _
    $region15: #{tpu_custom_call.1} parent=1 // pred_check_branch
      %18 = sbr.rel (0) target = $region17
    $region16: #{tpu_custom_call.1} parent=1 // pred_region
      _
    $region17: #{tpu_custom_call.1} parent=1 // pred_fallthru
      _
    // Predicated region
    $region18: #{tpu_custom_call.1} parent=1 // pred_check
      _
    $region19: #{tpu_custom_call.1} parent=1 // pred_check_branch
      %20 = sbr.rel (0) target = $region21
    $region20: #{tpu_custom_call.1} parent=1 // pred_region
      _
    $region21: #{tpu_custom_call.1} parent=1 // pred_fallthru
      _
    %p22 = scmp.eq.s32.totalorder 0, 0
    // Predicated region
    $region22: #{tpu_custom_call.1} parent=1 // pred_check
      %p23 = pneg %p22
    $region23: #{tpu_custom_call.1} parent=1 // pred_check_branch
      %25 = sbr.rel (%p23) target = $region25
    $region24: #{tpu_custom_call.1} parent=1 // pred_region
      %vm26 = vcmask 261120
      %27 = vst.msk [vmem:[#allocation2] sm:$0xff] %vm26, 0.0
      %28 = vst.msk [vmem:[#allocation2 + $0x8] sm:$0xff] %vm26, 0.0
    $region25: #{tpu_custom_call.1} parent=1 // pred_fallthru
      _
    %v29 = vld [vmem:[%s0] sm:$0xf]
    %v30 = vld [vmem:[%s0 + $0x4] sm:$0xf]
    %v31 = vld [vmem:[%s1] sm:$0xf]
    %v32 = vld [vmem:[%s1 + $0x4] sm:$0xf]
    %v33 = vld [vmem:[%s1 + $0x8] sm:$0xf]
    %v34 = vld [vmem:[%s1 + $0xc] sm:$0xf]
    %v35 = vld [vmem:[%s2] sm:$0x1]
    %v37 = vperm.slane %v35, 0
    %v41 = vunpack.c.l.b16 %v29
    %v42 = vunpack.c.l.b16 %v30
    %v43 = vpack.c.b16 %v42, %v41
    %v48 = vunpack.c.l.b16 %v31
    %v49 = vunpack.c.l.b16 %v32
    %v50 = vunpack.c.l.b16 %v33
    %v51 = vunpack.c.l.b16 %v34
    %v52 = vpack.c.b16 %v49, %v48
    %v53 = vpack.c.b16 %v51, %v50
    %vm56 = vcmask 261120
    %v58 = vsel %vm56, %v43, 0
    %60 = vmatpush.bf16.msra.mxu0 0
    %61 = vmatpush.bf16.msra.mxu0 0
    %62 = vmatpush.bf16.msra.mxu0 0
    %63 = vmatpush.bf16.msra.mxu0 0
    %64 = vmatpush.bf16.msra.mxu0 0
    %65 = vmatpush.bf16.msra.mxu0 0
    %66 = vmatpush.bf16.msra.mxu0 %v53
    %67 = vmatpush.bf16.msra.mxu0 %v52
    %68 = vmatmul.bf16.gmra.mxu0 %v58
    %v69 = vpop.f32.mrf.mxu0
    %v70 = vadd.f32 %v37, %v69
    %v71 = vpop.f32.mrf.mxu0
    %v72 = vadd.f32 %v37, %v71
    %73 = vdwg.mxu0
    %v74 = vmul.f32 %v70, 0.5
    %v75 = vmul.f32 %v72, 0.5
    %v76 = vmul.f32 %v70, 0.044715
    %v77 = vmul.f32 %v72, 0.044715
    %v78 = vmul.f32 %v76, %v70
    %v79 = vmul.f32 %v77, %v72
    %v80 = vmul.f32 %v78, %v70
    %v81 = vmul.f32 %v79, %v72
    %v82 = vadd.f32 %v70, %v80
    %v83 = vadd.f32 %v72, %v81
    %v84 = vmul.f32 %v82, 0.7978846
    %v85 = vmul.f32 %v83, 0.7978846
    %v86 = vtanh.pop %v84
    %v87 = vtanh.pop %v85
    %v88 = vadd.f32 %v86, 1.0
    %v89 = vadd.f32 %v87, 1.0
    %v90 = vmul.f32 %v74, %v88
    %v91 = vmul.f32 %v75, %v89
    %v92 = vld [vmem:[#allocation2] sm:$0xff]
    %v93 = vld [vmem:[#allocation2 + $0x8] sm:$0xff]
    %v94 = vpack.c.bf16 %v91, %v90
    %v95 = vld [vmem:[%s3] sm:$0xf]
    %v96 = vld [vmem:[%s3 + $0x4] sm:$0xf]
    %v97 = vld [vmem:[%s3 + $0x8] sm:$0xf]
    %v98 = vld [vmem:[%s3 + $0xc] sm:$0xf]
    %v99 = vld [vmem:[%s3 + $0x10] sm:$0xf]
    %v100 = vld [vmem:[%s3 + $0x14] sm:$0xf]
    %v101 = vld [vmem:[%s3 + $0x18] sm:$0xf]
    %v102 = vld [vmem:[%s3 + $0x1c] sm:$0xf]
    %v103 = vld [vmem:[%s3 + $0x20] sm:$0xf]
    %v104 = vld [vmem:[%s3 + $0x24] sm:$0xf]
    %v105 = vld [vmem:[%s3 + $0x28] sm:$0xf]
    %v106 = vld [vmem:[%s3 + $0x2c] sm:$0xf]
    %v107 = vld [vmem:[%s3 + $0x30] sm:$0xf]
    %v108 = vld [vmem:[%s3 + $0x34] sm:$0xf]
    %v109 = vld [vmem:[%s3 + $0x38] sm:$0xf]
    %v110 = vld [vmem:[%s3 + $0x3c] sm:$0xf]
    %v127 = vunpack.c.l.b16 %v95
    %v128 = vunpack.c.l.b16 %v96
    %v129 = vunpack.c.l.b16 %v97
    %v130 = vunpack.c.l.b16 %v98
    %v131 = vunpack.c.l.b16 %v99
    %v132 = vunpack.c.l.b16 %v100
    %v133 = vunpack.c.l.b16 %v101
    %v134 = vunpack.c.l.b16 %v102
    %v135 = vunpack.c.l.b16 %v103
    %v136 = vunpack.c.l.b16 %v104
    %v137 = vunpack.c.l.b16 %v105
    %v138 = vunpack.c.l.b16 %v106
    %v139 = vunpack.c.l.b16 %v107
    %v140 = vunpack.c.l.b16 %v108
    %v141 = vunpack.c.l.b16 %v109
    %v142 = vunpack.c.l.b16 %v110
    %v143 = vpack.c.b16 %v128, %v127
    %v144 = vpack.c.b16 %v130, %v129
    %v145 = vpack.c.b16 %v132, %v131
    %v146 = vpack.c.b16 %v134, %v133
    %v147 = vpack.c.b16 %v136, %v135
    %v148 = vpack.c.b16 %v138, %v137
    %v149 = vpack.c.b16 %v140, %v139
    %v150 = vpack.c.b16 %v142, %v141
    %159 = vmatpush.bf16.msra.mxu0 %v150
    %160 = vmatpush.bf16.msra.mxu0 %v149
    %161 = vmatpush.bf16.msra.mxu0 %v148
    %162 = vmatpush.bf16.msra.mxu0 %v147
    %163 = vmatpush.bf16.msra.mxu0 %v146
    %164 = vmatpush.bf16.msra.mxu0 %v145
    %165 = vmatpush.bf16.msra.mxu0 %v144
    %166 = vmatpush.bf16.msra.mxu0 %v143
    %167 = vmatmul.bf16.gmra.mxu0 %v94
    %v168 = vpop.f32.mrf.mxu0
    %v169 = vadd.f32 0.0, %v168
    %v170 = vpop.f32.mrf.mxu0
    %v171 = vadd.f32 0.0, %v170
    %172 = vdwg.mxu0
    %v173 = vadd.f32 %v92, %v169
    %v174 = vadd.f32 %v93, %v171
    %175 = vst.msk [vmem:[#allocation2] sm:$0xff] %vm56, %v173
    %176 = vst.msk [vmem:[#allocation2 + $0x8] sm:$0xff] %vm56, %v174
    // Predicated region
    $region26: #{tpu_custom_call.1} parent=1 // pred_check
      %p177 = pneg %p22
    $region27: #{tpu_custom_call.1} parent=1 // pred_check_branch
      %179 = sbr.rel (%p177) target = $region29
    $region28: #{tpu_custom_call.1} parent=1 // pred_region
      %v180 = vld [vmem:[#allocation2] sm:$0xff]
      %v181 = vld [vmem:[#allocation2 + $0x8] sm:$0xff]
      %v182 = vld [vmem:[%s4] sm:$0x1]
      %v184 = vperm.slane %v182, 0
      %v186 = vadd.f32 %v180, %v184
      %v187 = vadd.f32 %v181, %v184
      %188 = vst.msk [vmem:[#allocation3] sm:$0xff] %vm56, %v186
      %189 = vst.msk [vmem:[#allocation3 + $0x8] sm:$0xff] %vm56, %v187
    $region29: #{tpu_custom_call.1} parent=1 // pred_fallthru
      _
    // Predicated region
    $region30: #{tpu_custom_call.1} parent=1 // pred_check
      _
    $region31: #{tpu_custom_call.1} parent=1 // pred_check_branch
      %191 = sbr.rel (0) target = $region33
    $region32: #{tpu_custom_call.1} parent=1 // pred_region
      %193 = vsyncadd [#allocation4], 0
      %s194 = sshll.u32 [#allocation3], 4
      %s195 = int_to_ptr.vmem [resolvable:$true] %s194
      %s196 = sshll.u32 %s5, 4
      %s197 = int_to_ptr.hbm [resolvable:$true] %s196
      %202 = dma.vmem_to_hbm [thread:$0]  %s195, 256, %s197, [#allocation4], 128, 128, 8
    $region33: #{tpu_custom_call.1} parent=1 // pred_fallthru
      _
    // Predicated region
    $region34: #{tpu_custom_call.1} parent=1 // pred_check
      _
    $region35: #{tpu_custom_call.1} parent=1 // pred_check_branch
      %204 = sbr.rel (0) target = $region37
    $region36: #{tpu_custom_call.1} parent=1 // pred_region
      %206 = dma.done [#allocation4], 256
    $region37: #{tpu_custom_call.1} parent=1 // pred_fallthru
      _
    %207 = vsyncpa [#allocation4], 1

</llo_original>
